<compile_context>
chip_gen: v5e
topology: v5e:2x2
jax: 0.10.0
libtpu: 0.0.40
codegen_flags: <defaults>
</compile_context>

<pallas_src>
import jax
import jax.numpy as jnp
from jax.experimental import pallas as pl
from jax.experimental.pallas import tpu as pltpu

ACTION_DIM = 10
STATE_DIM = 203          # 200 firm features + 3 sector features
K_PAD = 256              # feature dim padded in VMEM only (203 -> 256)
H1 = 288                 # 256 (firm hidden) + 32 (sector hidden)
H2 = 160                 # 128 (firm out)    + 32 (sector out)
OUT_PAD = 128            # lane-dense output slab; cols 0:10 emissions, 10:20 agreeableness


# ---------------------------------------------------------------------------
# Kernel: one batch tile [TB, 203] -> [TB, OUT_PAD], 6 MXU matmuls.
# ---------------------------------------------------------------------------
def _qnet_kernel(x_ref,
                 w1_ref, b1_ref,      # blockdiag(firm L1, sector L1): [256,288]
                 w2_ref, b2_ref,      # blockdiag(firm L2, sector L2): [288,160]
                 ws1_ref, bs1_ref,    # shared L1: [160,256]
                 ws2_ref, bs2_ref,    # shared L2: [256,128]
                 wh1_ref, bh1_ref,    # fused head L1 (we1|wa1): [128,256]
                 wh2_ref, bh2_ref,    # fused head L2 blockdiag, padded: [256,128]
                 out_ref,
                 xp_ref):             # VMEM scratch [TB, 256], weight dtype
    f32 = jnp.float32

    def dense(x, w_ref, b_ref, relu=True):
        # Matmul inputs in the weight dtype (bf16 by default), f32 accumulate;
        # bias add and ReLU stay f32 (v5e VPU has no bf16).
        y = jnp.dot(x.astype(w_ref.dtype), w_ref[...],
                    preferred_element_type=f32) + b_ref[...]
        return jnp.maximum(y, 0.0) if relu else y

    # Zero-pad features 203 -> 256 in VMEM only.  Order matters: first zero
    # the last (aligned) 128-lane tile, then overwrite lanes 0:203 with data,
    # leaving lanes 203:256 zero to match the zero rows of w1.
    tb = x_ref.shape[0]
    xp_ref[:, K_PAD - 128:] = jnp.zeros((tb, 128), xp_ref.dtype)
    xp_ref[:, :STATE_DIM] = x_ref[...].astype(xp_ref.dtype)

    h = dense(xp_ref[...], w1_ref, b1_ref)     # [TB, 288]  firm|sector layer 1
    h = dense(h, w2_ref, b2_ref)               # [TB, 160]  == concat(firm_out, sector_out)
    h = dense(h, ws1_ref, bs1_ref)             # [TB, 256]  shared layer 1
    h = dense(h, ws2_ref, bs2_ref)             # [TB, 128]  shared layer 2
    h = dense(h, wh1_ref, bh1_ref)             # [TB, 256]  both head hiddens
    out_ref[...] = dense(h, wh2_ref, bh2_ref, relu=False).astype(out_ref.dtype)


# ---------------------------------------------------------------------------
# Parameter fusion (init time, not per-step work).
# ---------------------------------------------------------------------------
def fuse_params(params, compute_dtype=jnp.bfloat16):
    """Build block-diagonal / concatenated weights from PyTorch-shaped params
    (pre-transposed to [in, out]; biases [1, out]).  Weights are cast to
    `compute_dtype` (bf16 default: MXU-native on v5e/v6e/v7x); biases stay f32."""
    z = jnp.zeros
    # Branch layer 1: blockdiag(w1f [200,256], w1s [3,32]) padded to [256,288].
    w1 = z((K_PAD, H1), jnp.float32)
    w1 = w1.at[:200, :256].set(params["w1f"])
    w1 = w1.at[200:203, 256:].set(params["w1s"])
    b1 = jnp.concatenate([params["b1f"], params["b1s"]], axis=1)          # [1,288]
    # Branch layer 2: blockdiag(w2f [256,128], w2s [32,32]) -> [288,160].
    w2 = z((H1, H2), jnp.float32)
    w2 = w2.at[:256, :128].set(params["w2f"])
    w2 = w2.at[256:, 128:].set(params["w2s"])
    b2 = jnp.concatenate([params["b2f"], params["b2s"]], axis=1)          # [1,160]
    # Shared layers (unchanged shapes).
    ws1, bs1 = params["ws1"], params["bs1"]                               # [160,256],[1,256]
    ws2, bs2 = params["ws2"], params["bs2"]                               # [256,128],[1,128]
    # Heads layer 1: concat(we1, wa1) -> [128,256].
    wh1 = jnp.concatenate([params["we1"], params["wa1"]], axis=1)
    bh1 = jnp.concatenate([params["be1"], params["ba1"]], axis=1)         # [1,256]
    # Heads layer 2: blockdiag(we2, wa2) zero-padded to lane-dense [256,128].
    wh2 = z((256, OUT_PAD), jnp.float32)
    wh2 = wh2.at[:128, :ACTION_DIM].set(params["we2"])
    wh2 = wh2.at[128:, ACTION_DIM:2 * ACTION_DIM].set(params["wa2"])
    bh2 = z((1, OUT_PAD), jnp.float32)
    bh2 = bh2.at[:, :ACTION_DIM].set(params["be2"])
    bh2 = bh2.at[:, ACTION_DIM:2 * ACTION_DIM].set(params["ba2"])

    fused = dict(w1=w1, b1=b1, w2=w2, b2=b2, ws1=ws1, bs1=bs1, ws2=ws2, bs2=bs2,
                 wh1=wh1, bh1=bh1, wh2=wh2, bh2=bh2)
    for k in list(fused):
        if k.startswith("w"):
            fused[k] = fused[k].astype(compute_dtype)
    return fused


_FUSED_ORDER = ("w1", "b1", "w2", "b2", "ws1", "bs1", "ws2", "bs2",
                "wh1", "bh1", "wh2", "bh2")


def _round_up(x, m):
    return ((x + m - 1) // m) * m


def _pick_tb(batch, tb_max=512):
    """Batch tile: big enough to amortize per-grid-step overhead, but >=2 grid
    steps when B > 128 so v7x's two TensorCores both get work."""
    if batch <= 128:
        return max(8, _round_up(batch, 8))          # single tile
    return min(tb_max, _round_up(-(-batch // 2), 128))


# ---------------------------------------------------------------------------
# Wrapper: batch-tiled pallas_call with resident weights, no HBM padding.
# ---------------------------------------------------------------------------
def multitask_qnet_forward(state, fused, tb=None, out_dtype=jnp.float32):
    """state: [B, 203]. fused: output of fuse_params.
    Returns (emissions_q [B,10], agreeableness_q [B,10]) in `out_dtype`."""
    B, F = state.shape
    assert F == STATE_DIM
    if tb is None:
        tb = _pick_tb(B)
    assert tb % 8 == 0
    grid = (pl.cdiv(B, tb),)

    # Activation tiles stream (partial boundary tile masked by Pallas);
    # weights/biases use constant index_maps -> resident in VMEM.
    in_specs = [pl.BlockSpec((tb, STATE_DIM), lambda i: (i, 0))]
    in_specs += [pl.BlockSpec(fused[name].shape, lambda i: (0, 0))
                 for name in _FUSED_ORDER]

    w_dtype = fused["w1"].dtype
    flops = 2 * B * (K_PAD * H1 + H1 * H2 + H2 * 256 + 256 * 128
                     + 128 * 256 + 256 * OUT_PAD)
    bytes_accessed = (B * STATE_DIM * jnp.dtype(state.dtype).itemsize
                      + sum(int(fused[k].size) * jnp.dtype(fused[k].dtype).itemsize
                            for k in _FUSED_ORDER)
                      + B * OUT_PAD * jnp.dtype(out_dtype).itemsize)

    out = pl.pallas_call(
        _qnet_kernel,
        grid=grid,
        in_specs=in_specs,
        out_specs=pl.BlockSpec((tb, OUT_PAD), lambda i: (i, 0)),
        out_shape=jax.ShapeDtypeStruct((B, OUT_PAD), out_dtype),
        scratch_shapes=[pltpu.VMEM((tb, K_PAD), w_dtype)],
        compiler_params=pltpu.CompilerParams(
            dimension_semantics=("parallel",)),     # v7x: shard tiles over both TCs
        cost_estimate=pl.CostEstimate(
            flops=int(flops), transcendentals=0,
            bytes_accessed=int(bytes_accessed)),
    )(state, *(fused[name] for name in _FUSED_ORDER))

    emissions_q = out[:, :ACTION_DIM]
    agreeableness_q = out[:, ACTION_DIM:2 * ACTION_DIM]
    return emissions_q, agreeableness_q


# ---------------------------------------------------------------------------
# Synthetic parameters (PyTorch Linear shapes, pre-transposed to [in, out]).
# ---------------------------------------------------------------------------
def init_params(key):
    dims = {
        "1f": (200, 256), "2f": (256, 128),
        "1s": (3, 32), "2s": (32, 32),
        "s1": (160, 256), "s2": (256, 128),
        "e1": (128, 128), "e2": (128, ACTION_DIM),
        "a1": (128, 128), "a2": (128, ACTION_DIM),
    }
    keys = jax.random.split(key, 2 * len(dims))
    params = {}
    for i, (name, (din, dout)) in enumerate(dims.items()):
        wk, bk = keys[2 * i], keys[2 * i + 1]
        scale = 1.0 / (din ** 0.5)
        params["w" + name] = jax.random.uniform(wk, (din, dout), jnp.float32, -scale, scale)
        params["b" + name] = jax.random.uniform(bk, (1, dout), jnp.float32, -scale, scale)
    return params


# ---------------------------------------------------------------------------
# Pure-JAX reference identical to the PyTorch module semantics.
# ---------------------------------------------------------------------------
def reference_forward(state, params, compute_dtype=jnp.float32):
    cd = compute_dtype

    def lin(x, w, b):
        return jnp.dot(x.astype(cd), w.astype(cd),
                       preferred_element_type=jnp.float32) + b

    relu = lambda v: jnp.maximum(v, 0.0)
    firm, sector = state[:, :200], state[:, 200:]
    f = relu(lin(relu(lin(firm, params["w1f"], params["b1f"])), params["w2f"], params["b2f"]))
    s = relu(lin(relu(lin(sector, params["w1s"], params["b1s"])), params["w2s"], params["b2s"]))
    comb = jnp.concatenate([f, s], axis=1)
    sh = relu(lin(relu(lin(comb, params["ws1"], params["bs1"])), params["ws2"], params["bs2"]))
    e = lin(relu(lin(sh, params["we1"], params["be1"])), params["we2"], params["be2"])
    a = lin(relu(lin(sh, params["wa1"], params["ba1"])), params["wa2"], params["ba2"])
    return e, a


if __name__ == "__main__":
    key = jax.random.PRNGKey(0)
    pkey, xkey = jax.random.split(key)
    params = init_params(pkey)

    # --- Small batch, f32 weights, f32 output: exact check vs PyTorch semantics.
    B = 8
    state = jax.random.normal(xkey, (B, STATE_DIM), jnp.float32)
    fused_f32 = fuse_params(params, jnp.float32)
    e_k, a_k = multitask_qnet_forward(state, fused_f32)
    jax.block_until_ready((e_k, a_k))
    e_r, a_r = reference_forward(state, params)
    assert e_k.shape == (B, ACTION_DIM) and a_k.shape == (B, ACTION_DIM)
    assert jnp.allclose(e_k, e_r, atol=1e-4, rtol=1e-4)
    assert jnp.allclose(a_k, a_r, atol=1e-4, rtol=1e-4)

    # --- Larger batch: adaptive tb=512 (2 grid tiles, partial last tile),
    #     bf16 weights/activations, bf16 output slab.
    B2 = 1000
    state2 = jax.random.normal(jax.random.PRNGKey(1), (B2, STATE_DIM), jnp.float32)
    fused_bf16 = fuse_params(params)                       # bf16 default
    e2_k, a2_k = multitask_qnet_forward(state2, fused_bf16, out_dtype=jnp.bfloat16)
    jax.block_until_ready((e2_k, a2_k))
    e2_r, a2_r = reference_forward(state2, params, compute_dtype=jnp.bfloat16)
    assert e2_k.shape == (B2, ACTION_DIM) and a2_k.shape == (B2, ACTION_DIM)
    assert jnp.allclose(e2_k.astype(jnp.float32), e2_r, atol=3e-2, rtol=3e-2)
    assert jnp.allclose(a2_k.astype(jnp.float32), a2_r, atol=3e-2, rtol=3e-2)

    print("KERNEL_OK")
</pallas_src>

<mosaic_0001>
module attributes {stable_mosaic.version = 11 : i64} {
  func.func @_qnet_kernel(%arg0: i32, %arg1: memref<8x203xf32, #tpu.memory_space<vmem>>, %arg2: memref<256x288xf32, #tpu.memory_space<vmem>>, %arg3: memref<1x288xf32, #tpu.memory_space<vmem>>, %arg4: memref<288x160xf32, #tpu.memory_space<vmem>>, %arg5: memref<1x160xf32, #tpu.memory_space<vmem>>, %arg6: memref<160x256xf32, #tpu.memory_space<vmem>>, %arg7: memref<1x256xf32, #tpu.memory_space<vmem>>, %arg8: memref<256x128xf32, #tpu.memory_space<vmem>>, %arg9: memref<1x128xf32, #tpu.memory_space<vmem>>, %arg10: memref<128x256xf32, #tpu.memory_space<vmem>>, %arg11: memref<1x256xf32, #tpu.memory_space<vmem>>, %arg12: memref<256x128xf32, #tpu.memory_space<vmem>>, %arg13: memref<1x128xf32, #tpu.memory_space<vmem>>, %arg14: memref<8x128xf32, #tpu.memory_space<vmem>>, %arg15: memref<8x256xf32, #tpu.memory_space<vmem>>) attributes {dimension_semantics = [#tpu.dimension_semantics<parallel>], iteration_bounds = array<i64: 1>, scalar_prefetch = 0 : i64, scratch_operands = 1 : i64, tpu.core_type = #tpu.core_type<tc>, window_params = [{transform_indices = @transform_0, window_bounds = array<i64: 8, 203>}, {pipeline_mode = #tpu.pipeline_mode<synchronous>, transform_indices = @transform_1, window_bounds = array<i64: 256, 288>}, {pipeline_mode = #tpu.pipeline_mode<synchronous>, transform_indices = @transform_2, window_bounds = array<i64: 1, 288>}, {pipeline_mode = #tpu.pipeline_mode<synchronous>, transform_indices = @transform_3, window_bounds = array<i64: 288, 160>}, {pipeline_mode = #tpu.pipeline_mode<synchronous>, transform_indices = @transform_4, window_bounds = array<i64: 1, 160>}, {pipeline_mode = #tpu.pipeline_mode<synchronous>, transform_indices = @transform_5, window_bounds = array<i64: 160, 256>}, {pipeline_mode = #tpu.pipeline_mode<synchronous>, transform_indices = @transform_6, window_bounds = array<i64: 1, 256>}, {pipeline_mode = #tpu.pipeline_mode<synchronous>, transform_indices = @transform_7, window_bounds = array<i64: 256, 128>}, {pipeline_mode = #tpu.pipeline_mode<synchronous>, transform_indices = @transform_8, window_bounds = array<i64: 1, 128>}, {pipeline_mode = #tpu.pipeline_mode<synchronous>, transform_indices = @transform_9, window_bounds = array<i64: 128, 256>}, {pipeline_mode = #tpu.pipeline_mode<synchronous>, transform_indices = @transform_10, window_bounds = array<i64: 1, 256>}, {pipeline_mode = #tpu.pipeline_mode<synchronous>, transform_indices = @transform_11, window_bounds = array<i64: 256, 128>}, {pipeline_mode = #tpu.pipeline_mode<synchronous>, transform_indices = @transform_12, window_bounds = array<i64: 1, 128>}, {transform_indices = @transform_13, window_bounds = array<i64: 8, 128>}]} {
    %cst = arith.constant 0.000000e+00 : f32
    %0 = vector.broadcast %cst : f32 to vector<8x128xf32>
    %c0 = arith.constant 0 : index
    %c128 = arith.constant 128 : index
    %1 = vector.load %arg15[%c0, %c128] : memref<8x256xf32, #tpu.memory_space<vmem>>, vector<8x128xf32>
    tpu.vector_store %arg15[%c0, %c128], %0 {strides = array<i32>} : memref<8x256xf32, #tpu.memory_space<vmem>>, vector<8x128xf32>,
    %c0_0 = arith.constant 0 : index
    %c0_1 = arith.constant 0 : index
    %2 = vector.load %arg1[%c0_0, %c0_1] : memref<8x203xf32, #tpu.memory_space<vmem>>, vector<8x203xf32>
    %c0_2 = arith.constant 0 : index
    %c0_3 = arith.constant 0 : index
    %3 = vector.load %arg15[%c0_2, %c0_3] : memref<8x256xf32, #tpu.memory_space<vmem>>, vector<8x203xf32>
    tpu.vector_store %arg15[%c0_2, %c0_3], %2 {strides = array<i32>} : memref<8x256xf32, #tpu.memory_space<vmem>>, vector<8x203xf32>,
    %c0_4 = arith.constant 0 : index
    %c0_5 = arith.constant 0 : index
    %4 = vector.load %arg15[%c0_4, %c0_5] : memref<8x256xf32, #tpu.memory_space<vmem>>, vector<8x256xf32>
    %c0_6 = arith.constant 0 : index
    %c0_7 = arith.constant 0 : index
    %5 = vector.load %arg2[%c0_6, %c0_7] : memref<256x288xf32, #tpu.memory_space<vmem>>, vector<256x288xf32>
    %cst_8 = arith.constant dense<0.000000e+00> : vector<8x288xf32>
    %6 = tpu.matmul %4, %5, %cst_8 {dimension_numbers = #tpu.dot_dimension_numbers<[1], [0], [0], [1], [0, 0, 1, 1], [], []>} : vector<8x256xf32>, vector<256x288xf32>, vector<8x288xf32> -> vector<8x288xf32>
    %c0_9 = arith.constant 0 : index
    %c0_10 = arith.constant 0 : index
    %7 = vector.load %arg3[%c0_9, %c0_10] : memref<1x288xf32, #tpu.memory_space<vmem>>, vector<1x288xf32>
    %8 = vector.broadcast %7 : vector<1x288xf32> to vector<8x288xf32>
    %9 = arith.addf %6, %8 : vector<8x288xf32>
    %cst_11 = arith.constant 0.000000e+00 : f32
    %10 = vector.broadcast %cst_11 : f32 to vector<8x288xf32>
    %11 = arith.maximumf %9, %10 : vector<8x288xf32>
    %c0_12 = arith.constant 0 : index
    %c0_13 = arith.constant 0 : index
    %12 = vector.load %arg4[%c0_12, %c0_13] : memref<288x160xf32, #tpu.memory_space<vmem>>, vector<288x160xf32>
    %cst_14 = arith.constant dense<0.000000e+00> : vector<8x160xf32>
    %13 = tpu.matmul %11, %12, %cst_14 {dimension_numbers = #tpu.dot_dimension_numbers<[1], [0], [0], [1], [0, 0, 1, 1], [], []>} : vector<8x288xf32>, vector<288x160xf32>, vector<8x160xf32> -> vector<8x160xf32>
    %c0_15 = arith.constant 0 : index
    %c0_16 = arith.constant 0 : index
    %14 = vector.load %arg5[%c0_15, %c0_16] : memref<1x160xf32, #tpu.memory_space<vmem>>, vector<1x160xf32>
    %15 = vector.broadcast %14 : vector<1x160xf32> to vector<8x160xf32>
    %16 = arith.addf %13, %15 : vector<8x160xf32>
    %cst_17 = arith.constant 0.000000e+00 : f32
    %17 = vector.broadcast %cst_17 : f32 to vector<8x160xf32>
    %18 = arith.maximumf %16, %17 : vector<8x160xf32>
    %c0_18 = arith.constant 0 : index
    %c0_19 = arith.constant 0 : index
    %19 = vector.load %arg6[%c0_18, %c0_19] : memref<160x256xf32, #tpu.memory_space<vmem>>, vector<160x256xf32>
    %cst_20 = arith.constant dense<0.000000e+00> : vector<8x256xf32>
    %20 = tpu.matmul %18, %19, %cst_20 {dimension_numbers = #tpu.dot_dimension_numbers<[1], [0], [0], [1], [0, 0, 1, 1], [], []>} : vector<8x160xf32>, vector<160x256xf32>, vector<8x256xf32> -> vector<8x256xf32>
    %c0_21 = arith.constant 0 : index
    %c0_22 = arith.constant 0 : index
    %21 = vector.load %arg7[%c0_21, %c0_22] : memref<1x256xf32, #tpu.memory_space<vmem>>, vector<1x256xf32>
    %22 = vector.broadcast %21 : vector<1x256xf32> to vector<8x256xf32>
    %23 = arith.addf %20, %22 : vector<8x256xf32>
    %cst_23 = arith.constant 0.000000e+00 : f32
    %24 = vector.broadcast %cst_23 : f32 to vector<8x256xf32>
    %25 = arith.maximumf %23, %24 : vector<8x256xf32>
    %c0_24 = arith.constant 0 : index
    %c0_25 = arith.constant 0 : index
    %26 = vector.load %arg8[%c0_24, %c0_25] : memref<256x128xf32, #tpu.memory_space<vmem>>, vector<256x128xf32>
    %cst_26 = arith.constant dense<0.000000e+00> : vector<8x128xf32>
    %27 = tpu.matmul %25, %26, %cst_26 {dimension_numbers = #tpu.dot_dimension_numbers<[1], [0], [0], [1], [0, 0, 1, 1], [], []>} : vector<8x256xf32>, vector<256x128xf32>, vector<8x128xf32> -> vector<8x128xf32>
    %c0_27 = arith.constant 0 : index
    %c0_28 = arith.constant 0 : index
    %28 = vector.load %arg9[%c0_27, %c0_28] : memref<1x128xf32, #tpu.memory_space<vmem>>, vector<1x128xf32>
    %29 = vector.broadcast %28 : vector<1x128xf32> to vector<8x128xf32>
    %30 = arith.addf %27, %29 : vector<8x128xf32>
    %cst_29 = arith.constant 0.000000e+00 : f32
    %31 = vector.broadcast %cst_29 : f32 to vector<8x128xf32>
    %32 = arith.maximumf %30, %31 : vector<8x128xf32>
    %c0_30 = arith.constant 0 : index
    %c0_31 = arith.constant 0 : index
    %33 = vector.load %arg10[%c0_30, %c0_31] : memref<128x256xf32, #tpu.memory_space<vmem>>, vector<128x256xf32>
    %cst_32 = arith.constant dense<0.000000e+00> : vector<8x256xf32>
    %34 = tpu.matmul %32, %33, %cst_32 {dimension_numbers = #tpu.dot_dimension_numbers<[1], [0], [0], [1], [0, 0, 1, 1], [], []>} : vector<8x128xf32>, vector<128x256xf32>, vector<8x256xf32> -> vector<8x256xf32>
    %c0_33 = arith.constant 0 : index
    %c0_34 = arith.constant 0 : index
    %35 = vector.load %arg11[%c0_33, %c0_34] : memref<1x256xf32, #tpu.memory_space<vmem>>, vector<1x256xf32>
    %36 = vector.broadcast %35 : vector<1x256xf32> to vector<8x256xf32>
    %37 = arith.addf %34, %36 : vector<8x256xf32>
    %cst_35 = arith.constant 0.000000e+00 : f32
    %38 = vector.broadcast %cst_35 : f32 to vector<8x256xf32>
    %39 = arith.maximumf %37, %38 : vector<8x256xf32>
    %c0_36 = arith.constant 0 : index
    %c0_37 = arith.constant 0 : index
    %40 = vector.load %arg12[%c0_36, %c0_37] : memref<256x128xf32, #tpu.memory_space<vmem>>, vector<256x128xf32>
    %cst_38 = arith.constant dense<0.000000e+00> : vector<8x128xf32>
    %41 = tpu.matmul %39, %40, %cst_38 {dimension_numbers = #tpu.dot_dimension_numbers<[1], [0], [0], [1], [0, 0, 1, 1], [], []>} : vector<8x256xf32>, vector<256x128xf32>, vector<8x128xf32> -> vector<8x128xf32>
    %c0_39 = arith.constant 0 : index
    %c0_40 = arith.constant 0 : index
    %42 = vector.load %arg13[%c0_39, %c0_40] : memref<1x128xf32, #tpu.memory_space<vmem>>, vector<1x128xf32>
    %43 = vector.broadcast %42 : vector<1x128xf32> to vector<8x128xf32>
    %44 = arith.addf %41, %43 : vector<8x128xf32>
    %c0_41 = arith.constant 0 : index
    %c0_42 = arith.constant 0 : index
    %45 = vector.load %arg14[%c0_41, %c0_42] : memref<8x128xf32, #tpu.memory_space<vmem>>, vector<8x128xf32>
    tpu.vector_store %arg14[%c0_41, %c0_42], %44 {strides = array<i32>} : memref<8x128xf32, #tpu.memory_space<vmem>>, vector<8x128xf32>,
    return
  }
  func.func @transform_0(%arg0: i32) -> (i32, i32) {
    %c0_i32 = arith.constant 0 : i32
    %c0_i32_0 = arith.constant 0 : i32
    return %arg0, %c0_i32 : i32, i32
  }
  func.func @transform_1(%arg0: i32) -> (i32, i32) {
    %c0_i32 = arith.constant 0 : i32
    %c0_i32_0 = arith.constant 0 : i32
    %c0_i32_1 = arith.constant 0 : i32
    return %c0_i32, %c0_i32_0 : i32, i32
  }
  func.func @transform_2(%arg0: i32) -> (i32, i32) {
    %c0_i32 = arith.constant 0 : i32
    %c0_i32_0 = arith.constant 0 : i32
    %c0_i32_1 = arith.constant 0 : i32
    return %c0_i32, %c0_i32_0 : i32, i32
  }
  func.func @transform_3(%arg0: i32) -> (i32, i32) {
    %c0_i32 = arith.constant 0 : i32
    %c0_i32_0 = arith.constant 0 : i32
    %c0_i32_1 = arith.constant 0 : i32
    return %c0_i32, %c0_i32_0 : i32, i32
  }
  func.func @transform_4(%arg0: i32) -> (i32, i32) {
    %c0_i32 = arith.constant 0 : i32
    %c0_i32_0 = arith.constant 0 : i32
    %c0_i32_1 = arith.constant 0 : i32
    return %c0_i32, %c0_i32_0 : i32, i32
  }
  func.func @transform_5(%arg0: i32) -> (i32, i32) {
    %c0_i32 = arith.constant 0 : i32
    %c0_i32_0 = arith.constant 0 : i32
    %c0_i32_1 = arith.constant 0 : i32
    return %c0_i32, %c0_i32_0 : i32, i32
  }
  func.func @transform_6(%arg0: i32) -> (i32, i32) {
    %c0_i32 = arith.constant 0 : i32
    %c0_i32_0 = arith.constant 0 : i32
    %c0_i32_1 = arith.constant 0 : i32
    return %c0_i32, %c0_i32_0 : i32, i32
  }
  func.func @transform_7(%arg0: i32) -> (i32, i32) {
    %c0_i32 = arith.constant 0 : i32
    %c0_i32_0 = arith.constant 0 : i32
    %c0_i32_1 = arith.constant 0 : i32
    return %c0_i32, %c0_i32_0 : i32, i32
  }
  func.func @transform_8(%arg0: i32) -> (i32, i32) {
    %c0_i32 = arith.constant 0 : i32
    %c0_i32_0 = arith.constant 0 : i32
    %c0_i32_1 = arith.constant 0 : i32
    return %c0_i32, %c0_i32_0 : i32, i32
  }
  func.func @transform_9(%arg0: i32) -> (i32, i32) {
    %c0_i32 = arith.constant 0 : i32
    %c0_i32_0 = arith.constant 0 : i32
    %c0_i32_1 = arith.constant 0 : i32
    return %c0_i32, %c0_i32_0 : i32, i32
  }
  func.func @transform_10(%arg0: i32) -> (i32, i32) {
    %c0_i32 = arith.constant 0 : i32
    %c0_i32_0 = arith.constant 0 : i32
    %c0_i32_1 = arith.constant 0 : i32
    return %c0_i32, %c0_i32_0 : i32, i32
  }
  func.func @transform_11(%arg0: i32) -> (i32, i32) {
    %c0_i32 = arith.constant 0 : i32
    %c0_i32_0 = arith.constant 0 : i32
    %c0_i32_1 = arith.constant 0 : i32
    return %c0_i32, %c0_i32_0 : i32, i32
  }
  func.func @transform_12(%arg0: i32) -> (i32, i32) {
    %c0_i32 = arith.constant 0 : i32
    %c0_i32_0 = arith.constant 0 : i32
    %c0_i32_1 = arith.constant 0 : i32
    return %c0_i32, %c0_i32_0 : i32, i32
  }
  func.func @transform_13(%arg0: i32) -> (i32, i32) {
    %c0_i32 = arith.constant 0 : i32
    %c0_i32_0 = arith.constant 0 : i32
    return %arg0, %c0_i32 : i32, i32
  }
}

</mosaic_0001>

<llo_original>
// kernel: tpu_custom_call.1
$region0: #{tpu_custom_call.1}
  #allocation0 [shape = 'u32[]', space=smem, size = 0x4, offset = 0x4, fixed_abs, tag = 'smem constant byte address 0x4 - core index']
  #allocation1 [shape = 'u32[72,128]{1,0:T(1,128)}', space=vmem, size = 0x9000, scoped, tag = 'internal scratch']
  #allocation2 [shape = 'f32[8,256]{1,0:T(8,128)}', space=vmem, size = 0x2000, scoped, tag = 'scratch operand']
  %s0 = inlined_call_operand.vmem [shape: f32[8,203], index: 0, kind: input, shape index: {}]
  %s1 = inlined_call_operand.vmem [shape: f32[256,288], index: 1, kind: input, shape index: {}]
  %s2 = inlined_call_operand.vmem [shape: f32[1,288], index: 2, kind: input, shape index: {}]
  %s3 = inlined_call_operand.vmem [shape: f32[288,160], index: 3, kind: input, shape index: {}]
  %s4 = inlined_call_operand.vmem [shape: f32[1,160], index: 4, kind: input, shape index: {}]
  %s5 = inlined_call_operand.vmem [shape: f32[160,256], index: 5, kind: input, shape index: {}]
  %s6 = inlined_call_operand.vmem [shape: f32[1,256], index: 6, kind: input, shape index: {}]
  %s7 = inlined_call_operand.vmem [shape: f32[256,128], index: 7, kind: input, shape index: {}]
  %s8 = inlined_call_operand.vmem [shape: f32[1,128], index: 8, kind: input, shape index: {}]
  %s9 = inlined_call_operand.vmem [shape: f32[128,256], index: 9, kind: input, shape index: {}]
  %s10 = inlined_call_operand.vmem [shape: f32[1,256], index: 10, kind: input, shape index: {}]
  %s11 = inlined_call_operand.vmem [shape: f32[256,128], index: 11, kind: input, shape index: {}]
  %s12 = inlined_call_operand.vmem [shape: f32[1,128], index: 12, kind: input, shape index: {}]
  %s13 = inlined_call_operand.hbm [shape: f32[8,128], index: 13, kind: output, shape index: {}]
  %s14 = sld [smem:[#allocation0]]
  $region62: #{tpu_custom_call.1} parent=0
    _
  %s16 = ssub.s32 1, %s14
  %s17 = scalar_select 0, %s16, %s14
  $region1: #{tpu_custom_call.1} parent=0
    #allocation3 [shape = 'u8[4096]{0}', space=vmem, size = 0x1000, scoped, tag = 'output window, operand 0, single buffered']
    #allocation4 [shape = 's32[1]{0}', space=sflag, size = 0x4, scoped, tag = 'scoped memory for tpu_custom_call.1']
    %18 = vsyncpa [#allocation4], 0
    // Predicated region
    $region2: #{tpu_custom_call.1} parent=1 // pred_check
      _
    $region3: #{tpu_custom_call.1} parent=1 // pred_check_branch
      %20 = sbr.rel (0) target = $region5
    $region4: #{tpu_custom_call.1} parent=1 // pred_region
      _
    $region5: #{tpu_custom_call.1} parent=1 // pred_fallthru
      _
    // Predicated region
    $region6: #{tpu_custom_call.1} parent=1 // pred_check
      _
    $region7: #{tpu_custom_call.1} parent=1 // pred_check_branch
      %22 = sbr.rel (0) target = $region9
    $region8: #{tpu_custom_call.1} parent=1 // pred_region
      _
    $region9: #{tpu_custom_call.1} parent=1 // pred_fallthru
      _
    // Predicated region
    $region10: #{tpu_custom_call.1} parent=1 // pred_check
      _
    $region11: #{tpu_custom_call.1} parent=1 // pred_check_branch
      %24 = sbr.rel (0) target = $region13
    $region12: #{tpu_custom_call.1} parent=1 // pred_region
      _
    $region13: #{tpu_custom_call.1} parent=1 // pred_fallthru
      _
    // Predicated region
    $region14: #{tpu_custom_call.1} parent=1 // pred_check
      _
    $region15: #{tpu_custom_call.1} parent=1 // pred_check_branch
      %26 = sbr.rel (0) target = $region17
    $region16: #{tpu_custom_call.1} parent=1 // pred_region
      _
    $region17: #{tpu_custom_call.1} parent=1 // pred_fallthru
      _
    // Predicated region
    $region18: #{tpu_custom_call.1} parent=1 // pred_check
      _
    $region19: #{tpu_custom_call.1} parent=1 // pred_check_branch
      %28 = sbr.rel (0) target = $region21
    $region20: #{tpu_custom_call.1} parent=1 // pred_region
      _
    $region21: #{tpu_custom_call.1} parent=1 // pred_fallthru
      _
    // Predicated region
    $region22: #{tpu_custom_call.1} parent=1 // pred_check
      _
    $region23: #{tpu_custom_call.1} parent=1 // pred_check_branch
      %30 = sbr.rel (0) target = $region25
    $region24: #{tpu_custom_call.1} parent=1 // pred_region
      _
    $region25: #{tpu_custom_call.1} parent=1 // pred_fallthru
      _
    // Predicated region
    $region26: #{tpu_custom_call.1} parent=1 // pred_check
      _
    $region27: #{tpu_custom_call.1} parent=1 // pred_check_branch
      %32 = sbr.rel (0) target = $region29
    $region28: #{tpu_custom_call.1} parent=1 // pred_region
      _
    $region29: #{tpu_custom_call.1} parent=1 // pred_fallthru
      _
    // Predicated region
    $region30: #{tpu_custom_call.1} parent=1 // pred_check
      _
    $region31: #{tpu_custom_call.1} parent=1 // pred_check_branch
      %34 = sbr.rel (0) target = $region33
    $region32: #{tpu_custom_call.1} parent=1 // pred_region
      _
    $region33: #{tpu_custom_call.1} parent=1 // pred_fallthru
      _
    // Predicated region
    $region34: #{tpu_custom_call.1} parent=1 // pred_check
      _
    $region35: #{tpu_custom_call.1} parent=1 // pred_check_branch
      %36 = sbr.rel (0) target = $region37
    $region36: #{tpu_custom_call.1} parent=1 // pred_region
      _
    $region37: #{tpu_custom_call.1} parent=1 // pred_fallthru
      _
    // Predicated region
    $region38: #{tpu_custom_call.1} parent=1 // pred_check
      _
    $region39: #{tpu_custom_call.1} parent=1 // pred_check_branch
      %38 = sbr.rel (0) target = $region41
    $region40: #{tpu_custom_call.1} parent=1 // pred_region
      _
    $region41: #{tpu_custom_call.1} parent=1 // pred_fallthru
      _
    // Predicated region
    $region42: #{tpu_custom_call.1} parent=1 // pred_check
      _
    $region43: #{tpu_custom_call.1} parent=1 // pred_check_branch
      %40 = sbr.rel (0) target = $region45
    $region44: #{tpu_custom_call.1} parent=1 // pred_region
      _
    $region45: #{tpu_custom_call.1} parent=1 // pred_fallthru
      _
    // Predicated region
    $region46: #{tpu_custom_call.1} parent=1 // pred_check
      _
    $region47: #{tpu_custom_call.1} parent=1 // pred_check_branch
      %42 = sbr.rel (0) target = $region49
    $region48: #{tpu_custom_call.1} parent=1 // pred_region
      _
    $region49: #{tpu_custom_call.1} parent=1 // pred_fallthru
      _
    // Predicated region
    $region50: #{tpu_custom_call.1} parent=1 // pred_check
      _
    $region51: #{tpu_custom_call.1} parent=1 // pred_check_branch
      %44 = sbr.rel (0) target = $region53
    $region52: #{tpu_custom_call.1} parent=1 // pred_region
      _
    $region53: #{tpu_custom_call.1} parent=1 // pred_fallthru
      _
    %45 = vst [vmem:[#allocation2 + $0x8] sm:$0xff] 0.0
    %v46 = vld [vmem:[%s0] sm:$0xff]
    %v47 = vld [vmem:[%s0 + $0x8] sm:$0xff]
    %48 = vst [vmem:[#allocation2] sm:$0xff] %v46
    %vm49 = vcmask 613376
    %50 = vst.msk [vmem:[#allocation2 + $0x8] sm:$0xff] %vm49, %v47
    %v51 = vld [vmem:[#allocation2] sm:$0xff]
    %v52 = vld [vmem:[#allocation2 + $0x8] sm:$0xff]
    %v53 = vld [vmem:[%s1] sm:$0xff]
    %v54 = vld [vmem:[%s1 + $0x8] sm:$0xff]
    %v55 = vld [vmem:[%s1 + $0x10] sm:$0xff]
    %v56 = vld [vmem:[%s1 + $0x18] sm:$0xff]
    %v57 = vld [vmem:[%s1 + $0x20] sm:$0xff]
    %v58 = vld [vmem:[%s1 + $0x28] sm:$0xff]
    %v59 = vld [vmem:[%s1 + $0x30] sm:$0xff]
    %v60 = vld [vmem:[%s1 + $0x38] sm:$0xff]
    %v61 = vld [vmem:[%s1 + $0x40] sm:$0xff]
    %v62 = vld [vmem:[%s1 + $0x48] sm:$0xff]
    %v63 = vld [vmem:[%s1 + $0x50] sm:$0xff]
    %v64 = vld [vmem:[%s1 + $0x58] sm:$0xff]
    %v65 = vld [vmem:[%s1 + $0x60] sm:$0xff]
    %v66 = vld [vmem:[%s1 + $0x68] sm:$0xff]
    %v67 = vld [vmem:[%s1 + $0x70] sm:$0xff]
    %v68 = vld [vmem:[%s1 + $0x78] sm:$0xff]
    %v69 = vld [vmem:[%s1 + $0x80] sm:$0xff]
    %v70 = vld [vmem:[%s1 + $0x88] sm:$0xff]
    %v71 = vld [vmem:[%s1 + $0x90] sm:$0xff]
    %v72 = vld [vmem:[%s1 + $0x98] sm:$0xff]
    %v73 = vld [vmem:[%s1 + $0xa0] sm:$0xff]
    %v74 = vld [vmem:[%s1 + $0xa8] sm:$0xff]
    %v75 = vld [vmem:[%s1 + $0xb0] sm:$0xff]
    %v76 = vld [vmem:[%s1 + $0xb8] sm:$0xff]
    %v77 = vld [vmem:[%s1 + $0xc0] sm:$0xff]
    %v78 = vld [vmem:[%s1 + $0xc8] sm:$0xff]
    %v79 = vld [vmem:[%s1 + $0xd0] sm:$0xff]
    %v80 = vld [vmem:[%s1 + $0xd8] sm:$0xff]
    %v81 = vld [vmem:[%s1 + $0xe0] sm:$0xff]
    %v82 = vld [vmem:[%s1 + $0xe8] sm:$0xff]
    %v83 = vld [vmem:[%s1 + $0xf0] sm:$0xff]
    %v84 = vld [vmem:[%s1 + $0xf8] sm:$0xff]
    %v85 = vld [vmem:[%s1 + $0x100] sm:$0xff]
    %v86 = vld [vmem:[%s1 + $0x108] sm:$0xff]
    %v87 = vld [vmem:[%s1 + $0x110] sm:$0xff]
    %v88 = vld [vmem:[%s1 + $0x118] sm:$0xff]
    %v89 = vld [vmem:[%s1 + $0x120] sm:$0xff]
    %v90 = vld [vmem:[%s1 + $0x128] sm:$0xff]
    %v91 = vld [vmem:[%s1 + $0x130] sm:$0xff]
    %v92 = vld [vmem:[%s1 + $0x138] sm:$0xff]
    %v93 = vld [vmem:[%s1 + $0x140] sm:$0xff]
    %v94 = vld [vmem:[%s1 + $0x148] sm:$0xff]
    %v95 = vld [vmem:[%s1 + $0x150] sm:$0xff]
    %v96 = vld [vmem:[%s1 + $0x158] sm:$0xff]
    %v97 = vld [vmem:[%s1 + $0x160] sm:$0xff]
    %v98 = vld [vmem:[%s1 + $0x168] sm:$0xff]
    %v99 = vld [vmem:[%s1 + $0x170] sm:$0xff]
    %v100 = vld [vmem:[%s1 + $0x178] sm:$0xff]
    %v101 = vld [vmem:[%s1 + $0x180] sm:$0xff]
    %v102 = vld [vmem:[%s1 + $0x188] sm:$0xff]
    %v103 = vld [vmem:[%s1 + $0x190] sm:$0xff]
    %v104 = vld [vmem:[%s1 + $0x198] sm:$0xff]
    %v105 = vld [vmem:[%s1 + $0x1a0] sm:$0xff]
    %v106 = vld [vmem:[%s1 + $0x1a8] sm:$0xff]
    %v107 = vld [vmem:[%s1 + $0x1b0] sm:$0xff]
    %v108 = vld [vmem:[%s1 + $0x1b8] sm:$0xff]
    %v109 = vld [vmem:[%s1 + $0x1c0] sm:$0xff]
    %v110 = vld [vmem:[%s1 + $0x1c8] sm:$0xff]
    %v111 = vld [vmem:[%s1 + $0x1d0] sm:$0xff]
    %v112 = vld [vmem:[%s1 + $0x1d8] sm:$0xff]
    %v113 = vld [vmem:[%s1 + $0x1e0] sm:$0xff]
    %v114 = vld [vmem:[%s1 + $0x1e8] sm:$0xff]
    %v115 = vld [vmem:[%s1 + $0x1f0] sm:$0xff]
    %v116 = vld [vmem:[%s1 + $0x1f8] sm:$0xff]
    %v117 = vld [vmem:[%s1 + $0x200] sm:$0xff]
    %v118 = vld [vmem:[%s1 + $0x208] sm:$0xff]
    %v119 = vld [vmem:[%s1 + $0x210] sm:$0xff]
    %v120 = vld [vmem:[%s1 + $0x218] sm:$0xff]
    %v121 = vld [vmem:[%s1 + $0x220] sm:$0xff]
    %v122 = vld [vmem:[%s1 + $0x228] sm:$0xff]
    %v123 = vld [vmem:[%s1 + $0x230] sm:$0xff]
    %v124 = vld [vmem:[%s1 + $0x238] sm:$0xff]
    %v125 = vld [vmem:[%s1 + $0x240] sm:$0xff]
    %v126 = vld [vmem:[%s1 + $0x248] sm:$0xff]
    %v127 = vld [vmem:[%s1 + $0x250] sm:$0xff]
    %v128 = vld [vmem:[%s1 + $0x258] sm:$0xff]
    %v129 = vld [vmem:[%s1 + $0x260] sm:$0xff]
    %v130 = vld [vmem:[%s1 + $0x268] sm:$0xff]
    %v131 = vld [vmem:[%s1 + $0x270] sm:$0xff]
    %v132 = vld [vmem:[%s1 + $0x278] sm:$0xff]
    %v133 = vld [vmem:[%s1 + $0x280] sm:$0xff]
    %v134 = vld [vmem:[%s1 + $0x288] sm:$0xff]
    %v135 = vld [vmem:[%s1 + $0x290] sm:$0xff]
    %v136 = vld [vmem:[%s1 + $0x298] sm:$0xff]
    %v137 = vld [vmem:[%s1 + $0x2a0] sm:$0xff]
    %v138 = vld [vmem:[%s1 + $0x2a8] sm:$0xff]
    %v139 = vld [vmem:[%s1 + $0x2b0] sm:$0xff]
    %v140 = vld [vmem:[%s1 + $0x2b8] sm:$0xff]
    %v141 = vld [vmem:[%s1 + $0x2c0] sm:$0xff]
    %v142 = vld [vmem:[%s1 + $0x2c8] sm:$0xff]
    %v143 = vld [vmem:[%s1 + $0x2d0] sm:$0xff]
    %v144 = vld [vmem:[%s1 + $0x2d8] sm:$0xff]
    %v145 = vld [vmem:[%s1 + $0x2e0] sm:$0xff]
    %v146 = vld [vmem:[%s1 + $0x2e8] sm:$0xff]
    %v147 = vld [vmem:[%s1 + $0x2f0] sm:$0xff]
    %v148 = vld [vmem:[%s1 + $0x2f8] sm:$0xff]
    %v149 = vld [vmem:[%s2] sm:$0x7]
    %v151 = vperm.slane %v149, 0
    %v152 = vperm.slane %v149, 1
    %v153 = vperm.slane %v149, 2
    %157 = vmatpush.msra.mxu0 %v98
    %158 = vmatpush.msra.mxu0 %v95
    %159 = vmatpush.msra.mxu0 %v92
    %160 = vmatpush.msra.mxu0 %v89
    %161 = vmatpush.msra.mxu0 %v86
    %162 = vmatpush.msra.mxu0 %v83
    %163 = vmatpush.msra.mxu0 %v80
    %164 = vmatpush.msra.mxu0 %v77
    %165 = vmatpush.msra.mxu0 %v74
    %166 = vmatpush.msra.mxu0 %v71
    %167 = vmatpush.msra.mxu0 %v68
    %168 = vmatpush.msra.mxu0 %v65
    %169 = vmatpush.msra.mxu0 %v62
    %170 = vmatpush.msra.mxu0 %v59
    %171 = vmatpush.msra.mxu0 %v56
    %172 = vmatpush.msra.mxu0 %v53
    %173 = vmatmul.f32.gmra.mxu0 %v51
    %v174 = vpop.f32.mrf.mxu0
    %v175 = vadd.f32 %v151, %v174
    %176 = vdwg.mxu0
    %177 = vmatpush.msra.mxu0 %v146
    %178 = vmatpush.msra.mxu0 %v143
    %179 = vmatpush.msra.mxu0 %v140
    %180 = vmatpush.msra.mxu0 %v137
    %181 = vmatpush.msra.mxu0 %v134
    %182 = vmatpush.msra.mxu0 %v131
    %183 = vmatpush.msra.mxu0 %v128
    %184 = vmatpush.msra.mxu0 %v125
    %185 = vmatpush.msra.mxu0 %v122
    %186 = vmatpush.msra.mxu0 %v119
    %187 = vmatpush.msra.mxu0 %v116
    %188 = vmatpush.msra.mxu0 %v113
    %189 = vmatpush.msra.mxu0 %v110
    %190 = vmatpush.msra.mxu0 %v107
    %191 = vmatpush.msra.mxu0 %v104
    %192 = vmatpush.msra.mxu0 %v101
    %193 = vmatmul.f32.gmra.mxu0 %v52
    %v194 = vpop.f32.mrf.mxu0
    %v195 = vadd.f32 %v175, %v194
    %196 = vdwg.mxu0
    %197 = vmatpush.msra.mxu0 %v99
    %198 = vmatpush.msra.mxu0 %v96
    %199 = vmatpush.msra.mxu0 %v93
    %200 = vmatpush.msra.mxu0 %v90
    %201 = vmatpush.msra.mxu0 %v87
    %202 = vmatpush.msra.mxu0 %v84
    %203 = vmatpush.msra.mxu0 %v81
    %204 = vmatpush.msra.mxu0 %v78
    %205 = vmatpush.msra.mxu0 %v75
    %206 = vmatpush.msra.mxu0 %v72
    %207 = vmatpush.msra.mxu0 %v69
    %208 = vmatpush.msra.mxu0 %v66
    %209 = vmatpush.msra.mxu0 %v63
    %210 = vmatpush.msra.mxu0 %v60
    %211 = vmatpush.msra.mxu0 %v57
    %212 = vmatpush.msra.mxu0 %v54
    %213 = vmatmul.f32.gmra.mxu0 %v51
    %v214 = vpop.f32.mrf.mxu0
    %v215 = vadd.f32 %v152, %v214
    %216 = vdwg.mxu0
    %217 = vmatpush.msra.mxu0 %v147
    %218 = vmatpush.msra.mxu0 %v144
    %219 = vmatpush.msra.mxu0 %v141
    %220 = vmatpush.msra.mxu0 %v138
    %221 = vmatpush.msra.mxu0 %v135
    %222 = vmatpush.msra.mxu0 %v132
    %223 = vmatpush.msra.mxu0 %v129
    %224 = vmatpush.msra.mxu0 %v126
    %225 = vmatpush.msra.mxu0 %v123
    %226 = vmatpush.msra.mxu0 %v120
    %227 = vmatpush.msra.mxu0 %v117
    %228 = vmatpush.msra.mxu0 %v114
    %229 = vmatpush.msra.mxu0 %v111
    %230 = vmatpush.msra.mxu0 %v108
    %231 = vmatpush.msra.mxu0 %v105
    %232 = vmatpush.msra.mxu0 %v102
    %233 = vmatmul.f32.gmra.mxu0 %v52
    %v234 = vpop.f32.mrf.mxu0
    %v235 = vadd.f32 %v215, %v234
    %236 = vdwg.mxu0
    %237 = vmatpush.msra.mxu0 %v100
    %238 = vmatpush.msra.mxu0 %v97
    %239 = vmatpush.msra.mxu0 %v94
    %240 = vmatpush.msra.mxu0 %v91
    %241 = vmatpush.msra.mxu0 %v88
    %242 = vmatpush.msra.mxu0 %v85
    %243 = vmatpush.msra.mxu0 %v82
    %244 = vmatpush.msra.mxu0 %v79
    %245 = vmatpush.msra.mxu0 %v76
    %246 = vmatpush.msra.mxu0 %v73
    %247 = vmatpush.msra.mxu0 %v70
    %248 = vmatpush.msra.mxu0 %v67
    %249 = vmatpush.msra.mxu0 %v64
    %250 = vmatpush.msra.mxu0 %v61
    %251 = vmatpush.msra.mxu0 %v58
    %252 = vmatpush.msra.mxu0 %v55
    %253 = vmatmul.f32.gmra.mxu0 %v51
    %v254 = vpop.f32.mrf.mxu0
    %v255 = vadd.f32 %v153, %v254
    %256 = vdwg.mxu0
    %257 = vmatpush.msra.mxu0 %v148
    %258 = vmatpush.msra.mxu0 %v145
    %259 = vmatpush.msra.mxu0 %v142
    %260 = vmatpush.msra.mxu0 %v139
    %261 = vmatpush.msra.mxu0 %v136
    %262 = vmatpush.msra.mxu0 %v133
    %263 = vmatpush.msra.mxu0 %v130
    %264 = vmatpush.msra.mxu0 %v127
    %265 = vmatpush.msra.mxu0 %v124
    %266 = vmatpush.msra.mxu0 %v121
    %267 = vmatpush.msra.mxu0 %v118
    %268 = vmatpush.msra.mxu0 %v115
    %269 = vmatpush.msra.mxu0 %v112
    %270 = vmatpush.msra.mxu0 %v109
    %271 = vmatpush.msra.mxu0 %v106
    %272 = vmatpush.msra.mxu0 %v103
    %273 = vmatmul.f32.gmra.mxu0 %v52
    %v274 = vpop.f32.mrf.mxu0
    %v275 = vadd.f32 %v255, %v274
    %276 = vdwg.mxu0
    %v277 = vmax.f32 %v195, 0.0
    %v278 = vmax.f32 %v235, 0.0
    %v279 = vmax.f32 %v275, 0.0
    %v280 = vld [vmem:[%s3] sm:$0xff]
    %v281 = vld [vmem:[%s3 + $0x8] sm:$0xff]
    %v282 = vld [vmem:[%s3 + $0x10] sm:$0xff]
    %v283 = vld [vmem:[%s3 + $0x18] sm:$0xff]
    %v284 = vld [vmem:[%s3 + $0x20] sm:$0xff]
    %v285 = vld [vmem:[%s3 + $0x28] sm:$0xff]
    %v286 = vld [vmem:[%s3 + $0x30] sm:$0xff]
    %v287 = vld [vmem:[%s3 + $0x38] sm:$0xff]
    %v288 = vld [vmem:[%s3 + $0x40] sm:$0xff]
    %v289 = vld [vmem:[%s3 + $0x48] sm:$0xff]
    %v290 = vld [vmem:[%s3 + $0x50] sm:$0xff]
    %v291 = vld [vmem:[%s3 + $0x58] sm:$0xff]
    %v292 = vld [vmem:[%s3 + $0x60] sm:$0xff]
    %v293 = vld [vmem:[%s3 + $0x68] sm:$0xff]
    %v294 = vld [vmem:[%s3 + $0x70] sm:$0xff]
    %v295 = vld [vmem:[%s3 + $0x78] sm:$0xff]
    %v296 = vld [vmem:[%s3 + $0x80] sm:$0xff]
    %v297 = vld [vmem:[%s3 + $0x88] sm:$0xff]
    %v298 = vld [vmem:[%s3 + $0x90] sm:$0xff]
    %v299 = vld [vmem:[%s3 + $0x98] sm:$0xff]
    %v300 = vld [vmem:[%s3 + $0xa0] sm:$0xff]
    %v301 = vld [vmem:[%s3 + $0xa8] sm:$0xff]
    %v302 = vld [vmem:[%s3 + $0xb0] sm:$0xff]
    %v303 = vld [vmem:[%s3 + $0xb8] sm:$0xff]
    %v304 = vld [vmem:[%s3 + $0xc0] sm:$0xff]
    %v305 = vld [vmem:[%s3 + $0xc8] sm:$0xff]
    %v306 = vld [vmem:[%s3 + $0xd0] sm:$0xff]
    %v307 = vld [vmem:[%s3 + $0xd8] sm:$0xff]
    %v308 = vld [vmem:[%s3 + $0xe0] sm:$0xff]
    %v309 = vld [vmem:[%s3 + $0xe8] sm:$0xff]
    %v310 = vld [vmem:[%s3 + $0xf0] sm:$0xff]
    %v311 = vld [vmem:[%s3 + $0xf8] sm:$0xff]
    %v312 = vld [vmem:[%s3 + $0x100] sm:$0xff]
    %v313 = vld [vmem:[%s3 + $0x108] sm:$0xff]
    %v314 = vld [vmem:[%s3 + $0x110] sm:$0xff]
    %v315 = vld [vmem:[%s3 + $0x118] sm:$0xff]
    %v316 = vld [vmem:[%s3 + $0x120] sm:$0xff]
    %v317 = vld [vmem:[%s3 + $0x128] sm:$0xff]
    %v318 = vld [vmem:[%s3 + $0x130] sm:$0xff]
    %v319 = vld [vmem:[%s3 + $0x138] sm:$0xff]
    %v320 = vld [vmem:[%s3 + $0x140] sm:$0xff]
    %v321 = vld [vmem:[%s3 + $0x148] sm:$0xff]
    %v322 = vld [vmem:[%s3 + $0x150] sm:$0xff]
    %v323 = vld [vmem:[%s3 + $0x158] sm:$0xff]
    %v324 = vld [vmem:[%s3 + $0x160] sm:$0xff]
    %v325 = vld [vmem:[%s3 + $0x168] sm:$0xff]
    %v326 = vld [vmem:[%s3 + $0x170] sm:$0xff]
    %v327 = vld [vmem:[%s3 + $0x178] sm:$0xff]
    %v328 = vld [vmem:[%s3 + $0x180] sm:$0xff]
    %v329 = vld [vmem:[%s3 + $0x188] sm:$0xff]
    %v330 = vld [vmem:[%s3 + $0x190] sm:$0xff]
    %v331 = vld [vmem:[%s3 + $0x198] sm:$0xff]
    %v332 = vld [vmem:[%s3 + $0x1a0] sm:$0xff]
    %v333 = vld [vmem:[%s3 + $0x1a8] sm:$0xff]
    %v334 = vld [vmem:[%s3 + $0x1b0] sm:$0xff]
    %v335 = vld [vmem:[%s3 + $0x1b8] sm:$0xff]
    %v336 = vld [vmem:[%s3 + $0x1c0] sm:$0xff]
    %v337 = vld [vmem:[%s3 + $0x1c8] sm:$0xff]
    %v338 = vld [vmem:[%s3 + $0x1d0] sm:$0xff]
    %v339 = vld [vmem:[%s3 + $0x1d8] sm:$0xff]
    %v340 = vld [vmem:[%s3 + $0x1e0] sm:$0xff]
    %v341 = vld [vmem:[%s3 + $0x1e8] sm:$0xff]
    %v342 = vld [vmem:[%s3 + $0x1f0] sm:$0xff]
    %v343 = vld [vmem:[%s3 + $0x1f8] sm:$0xff]
    %v344 = vld [vmem:[%s3 + $0x200] sm:$0xff]
    %v345 = vld [vmem:[%s3 + $0x208] sm:$0xff]
    %v346 = vld [vmem:[%s3 + $0x210] sm:$0xff]
    %v347 = vld [vmem:[%s3 + $0x218] sm:$0xff]
    %v348 = vld [vmem:[%s3 + $0x220] sm:$0xff]
    %v349 = vld [vmem:[%s3 + $0x228] sm:$0xff]
    %v350 = vld [vmem:[%s3 + $0x230] sm:$0xff]
    %v351 = vld [vmem:[%s3 + $0x238] sm:$0xff]
    %v352 = vld [vmem:[%s4] sm:$0x3]
    %v354 = vperm.slane %v352, 0
    %v355 = vperm.slane %v352, 1
    %vm358 = vcmask 261120
    %v360 = vsel %vm358, %v279, 0
    %362 = vmatpush.msra.mxu0 %v310
    %363 = vmatpush.msra.mxu0 %v308
    %364 = vmatpush.msra.mxu0 %v306
    %365 = vmatpush.msra.mxu0 %v304
    %366 = vmatpush.msra.mxu0 %v302
    %367 = vmatpush.msra.mxu0 %v300
    %368 = vmatpush.msra.mxu0 %v298
    %369 = vmatpush.msra.mxu0 %v296
    %370 = vmatpush.msra.mxu0 %v294
    %371 = vmatpush.msra.mxu0 %v292
    %372 = vmatpush.msra.mxu0 %v290
    %373 = vmatpush.msra.mxu0 %v288
    %374 = vmatpush.msra.mxu0 %v286
    %375 = vmatpush.msra.mxu0 %v284
    %376 = vmatpush.msra.mxu0 %v282
    %377 = vmatpush.msra.mxu0 %v280
    %378 = vmatmul.f32.gmra.mxu0 %v277
    %v379 = vpop.f32.mrf.mxu0
    %v380 = vadd.f32 %v354, %v379
    %381 = vdwg.mxu0
    %382 = vmatpush.msra.mxu0 %v342
    %383 = vmatpush.msra.mxu0 %v340
    %384 = vmatpush.msra.mxu0 %v338
    %385 = vmatpush.msra.mxu0 %v336
    %386 = vmatpush.msra.mxu0 %v334
    %387 = vmatpush.msra.mxu0 %v332
    %388 = vmatpush.msra.mxu0 %v330
    %389 = vmatpush.msra.mxu0 %v328
    %390 = vmatpush.msra.mxu0 %v326
    %391 = vmatpush.msra.mxu0 %v324
    %392 = vmatpush.msra.mxu0 %v322
    %393 = vmatpush.msra.mxu0 %v320
    %394 = vmatpush.msra.mxu0 %v318
    %395 = vmatpush.msra.mxu0 %v316
    %396 = vmatpush.msra.mxu0 %v314
    %397 = vmatpush.msra.mxu0 %v312
    %398 = vmatmul.f32.gmra.mxu0 %v278
    %v399 = vpop.f32.mrf.mxu0
    %v400 = vadd.f32 %v380, %v399
    %401 = vdwg.mxu0
    %402 = vmatpush.msra.mxu0 0.0
    %403 = vmatpush.msra.mxu0 0.0
    %404 = vmatpush.msra.mxu0 0.0
    %405 = vmatpush.msra.mxu0 0.0
    %406 = vmatpush.msra.mxu0 0.0
    %407 = vmatpush.msra.mxu0 0.0
    %408 = vmatpush.msra.mxu0 0.0
    %409 = vmatpush.msra.mxu0 0.0
    %410 = vmatpush.msra.mxu0 0.0
    %411 = vmatpush.msra.mxu0 0.0
    %412 = vmatpush.msra.mxu0 0.0
    %413 = vmatpush.msra.mxu0 0.0
    %414 = vmatpush.msra.mxu0 %v350
    %415 = vmatpush.msra.mxu0 %v348
    %416 = vmatpush.msra.mxu0 %v346
    %417 = vmatpush.msra.mxu0 %v344
    %418 = vmatmul.f32.gmra.mxu0 %v360
    %v419 = vpop.f32.mrf.mxu0
    %v420 = vadd.f32 %v400, %v419
    %421 = vdwg.mxu0
    %422 = vmatpush.msra.mxu0 %v311
    %423 = vmatpush.msra.mxu0 %v309
    %424 = vmatpush.msra.mxu0 %v307
    %425 = vmatpush.msra.mxu0 %v305
    %426 = vmatpush.msra.mxu0 %v303
    %427 = vmatpush.msra.mxu0 %v301
    %428 = vmatpush.msra.mxu0 %v299
    %429 = vmatpush.msra.mxu0 %v297
    %430 = vmatpush.msra.mxu0 %v295
    %431 = vmatpush.msra.mxu0 %v293
    %432 = vmatpush.msra.mxu0 %v291
    %433 = vmatpush.msra.mxu0 %v289
    %434 = vmatpush.msra.mxu0 %v287
    %435 = vmatpush.msra.mxu0 %v285
    %436 = vmatpush.msra.mxu0 %v283
    %437 = vmatpush.msra.mxu0 %v281
    %438 = vmatmul.f32.gmra.mxu0 %v277
    %v439 = vpop.f32.mrf.mxu0
    %v440 = vadd.f32 %v355, %v439
    %441 = vdwg.mxu0
    %442 = vmatpush.msra.mxu0 %v343
    %443 = vmatpush.msra.mxu0 %v341
    %444 = vmatpush.msra.mxu0 %v339
    %445 = vmatpush.msra.mxu0 %v337
    %446 = vmatpush.msra.mxu0 %v335
    %447 = vmatpush.msra.mxu0 %v333
    %448 = vmatpush.msra.mxu0 %v331
    %449 = vmatpush.msra.mxu0 %v329
    %450 = vmatpush.msra.mxu0 %v327
    %451 = vmatpush.msra.mxu0 %v325
    %452 = vmatpush.msra.mxu0 %v323
    %453 = vmatpush.msra.mxu0 %v321
    %454 = vmatpush.msra.mxu0 %v319
    %455 = vmatpush.msra.mxu0 %v317
    %456 = vmatpush.msra.mxu0 %v315
    %457 = vmatpush.msra.mxu0 %v313
    %458 = vmatmul.f32.gmra.mxu0 %v278
    %v459 = vpop.f32.mrf.mxu0
    %v460 = vadd.f32 %v440, %v459
    %461 = vdwg.mxu0
    %462 = vmatpush.msra.mxu0 0.0
    %463 = vmatpush.msra.mxu0 0.0
    %464 = vmatpush.msra.mxu0 0.0
    %465 = vmatpush.msra.mxu0 0.0
    %466 = vmatpush.msra.mxu0 0.0
    %467 = vmatpush.msra.mxu0 0.0
    %468 = vmatpush.msra.mxu0 0.0
    %469 = vmatpush.msra.mxu0 0.0
    %470 = vmatpush.msra.mxu0 0.0
    %471 = vmatpush.msra.mxu0 0.0
    %472 = vmatpush.msra.mxu0 0.0
    %473 = vmatpush.msra.mxu0 0.0
    %474 = vmatpush.msra.mxu0 %v351
    %475 = vmatpush.msra.mxu0 %v349
    %476 = vmatpush.msra.mxu0 %v347
    %477 = vmatpush.msra.mxu0 %v345
    %478 = vmatmul.f32.gmra.mxu0 %v360
    %v479 = vpop.f32.mrf.mxu0
    %v480 = vadd.f32 %v460, %v479
    %481 = vdwg.mxu0
    %v482 = vmax.f32 %v420, 0.0
    %v483 = vmax.f32 %v480, 0.0
    %v484 = vld [vmem:[%s5] sm:$0xff]
    %v485 = vld [vmem:[%s5 + $0x8] sm:$0xff]
    %v486 = vld [vmem:[%s5 + $0x10] sm:$0xff]
    %v487 = vld [vmem:[%s5 + $0x18] sm:$0xff]
    %v488 = vld [vmem:[%s5 + $0x20] sm:$0xff]
    %v489 = vld [vmem:[%s5 + $0x28] sm:$0xff]
    %v490 = vld [vmem:[%s5 + $0x30] sm:$0xff]
    %v491 = vld [vmem:[%s5 + $0x38] sm:$0xff]
    %v492 = vld [vmem:[%s5 + $0x40] sm:$0xff]
    %v493 = vld [vmem:[%s5 + $0x48] sm:$0xff]
    %v494 = vld [vmem:[%s5 + $0x50] sm:$0xff]
    %v495 = vld [vmem:[%s5 + $0x58] sm:$0xff]
    %v496 = vld [vmem:[%s5 + $0x60] sm:$0xff]
    %v497 = vld [vmem:[%s5 + $0x68] sm:$0xff]
    %v498 = vld [vmem:[%s5 + $0x70] sm:$0xff]
    %v499 = vld [vmem:[%s5 + $0x78] sm:$0xff]
    %v500 = vld [vmem:[%s5 + $0x80] sm:$0xff]
    %v501 = vld [vmem:[%s5 + $0x88] sm:$0xff]
    %v502 = vld [vmem:[%s5 + $0x90] sm:$0xff]
    %v503 = vld [vmem:[%s5 + $0x98] sm:$0xff]
    %v504 = vld [vmem:[%s5 + $0xa0] sm:$0xff]
    %v505 = vld [vmem:[%s5 + $0xa8] sm:$0xff]
    %v506 = vld [vmem:[%s5 + $0xb0] sm:$0xff]
    %v507 = vld [vmem:[%s5 + $0xb8] sm:$0xff]
    %v508 = vld [vmem:[%s5 + $0xc0] sm:$0xff]
    %v509 = vld [vmem:[%s5 + $0xc8] sm:$0xff]
    %v510 = vld [vmem:[%s5 + $0xd0] sm:$0xff]
    %v511 = vld [vmem:[%s5 + $0xd8] sm:$0xff]
    %v512 = vld [vmem:[%s5 + $0xe0] sm:$0xff]
    %v513 = vld [vmem:[%s5 + $0xe8] sm:$0xff]
    %v514 = vld [vmem:[%s5 + $0xf0] sm:$0xff]
    %v515 = vld [vmem:[%s5 + $0xf8] sm:$0xff]
    %v516 = vld [vmem:[%s5 + $0x100] sm:$0xff]
    %v517 = vld [vmem:[%s5 + $0x108] sm:$0xff]
    %v518 = vld [vmem:[%s5 + $0x110] sm:$0xff]
    %v519 = vld [vmem:[%s5 + $0x118] sm:$0xff]
    %v520 = vld [vmem:[%s5 + $0x120] sm:$0xff]
    %v521 = vld [vmem:[%s5 + $0x128] sm:$0xff]
    %v522 = vld [vmem:[%s5 + $0x130] sm:$0xff]
    %v523 = vld [vmem:[%s5 + $0x138] sm:$0xff]
    %v524 = vld [vmem:[%s6] sm:$0x3]
    %v526 = vperm.slane %v524, 0
    %v527 = vperm.slane %v524, 1
    %v531 = vsel %vm358, %v483, 0
    %533 = vmatpush.msra.mxu0 %v514
    %534 = vmatpush.msra.mxu0 %v512
    %535 = vmatpush.msra.mxu0 %v510
    %536 = vmatpush.msra.mxu0 %v508
    %537 = vmatpush.msra.mxu0 %v506
    %538 = vmatpush.msra.mxu0 %v504
    %539 = vmatpush.msra.mxu0 %v502
    %540 = vmatpush.msra.mxu0 %v500
    %541 = vmatpush.msra.mxu0 %v498
    %542 = vmatpush.msra.mxu0 %v496
    %543 = vmatpush.msra.mxu0 %v494
    %544 = vmatpush.msra.mxu0 %v492
    %545 = vmatpush.msra.mxu0 %v490
    %546 = vmatpush.msra.mxu0 %v488
    %547 = vmatpush.msra.mxu0 %v486
    %548 = vmatpush.msra.mxu0 %v484
    %549 = vmatmul.f32.gmra.mxu0 %v482
    %v550 = vpop.f32.mrf.mxu0
    %v551 = vadd.f32 %v526, %v550
    %552 = vdwg.mxu0
    %553 = vmatpush.msra.mxu0 0.0
    %554 = vmatpush.msra.mxu0 0.0
    %555 = vmatpush.msra.mxu0 0.0
    %556 = vmatpush.msra.mxu0 0.0
    %557 = vmatpush.msra.mxu0 0.0
    %558 = vmatpush.msra.mxu0 0.0
    %559 = vmatpush.msra.mxu0 0.0
    %560 = vmatpush.msra.mxu0 0.0
    %561 = vmatpush.msra.mxu0 0.0
    %562 = vmatpush.msra.mxu0 0.0
    %563 = vmatpush.msra.mxu0 0.0
    %564 = vmatpush.msra.mxu0 0.0
    %565 = vmatpush.msra.mxu0 %v522
    %566 = vmatpush.msra.mxu0 %v520
    %567 = vmatpush.msra.mxu0 %v518
    %568 = vmatpush.msra.mxu0 %v516
    %569 = vmatmul.f32.gmra.mxu0 %v531
    %v570 = vpop.f32.mrf.mxu0
    %v571 = vadd.f32 %v551, %v570
    %572 = vdwg.mxu0
    %573 = vmatpush.msra.mxu0 %v515
    %574 = vmatpush.msra.mxu0 %v513
    %575 = vmatpush.msra.mxu0 %v511
    %576 = vmatpush.msra.mxu0 %v509
    %577 = vmatpush.msra.mxu0 %v507
    %578 = vmatpush.msra.mxu0 %v505
    %579 = vmatpush.msra.mxu0 %v503
    %580 = vmatpush.msra.mxu0 %v501
    %581 = vmatpush.msra.mxu0 %v499
    %582 = vmatpush.msra.mxu0 %v497
    %583 = vmatpush.msra.mxu0 %v495
    %584 = vmatpush.msra.mxu0 %v493
    %585 = vmatpush.msra.mxu0 %v491
    %586 = vmatpush.msra.mxu0 %v489
    %587 = vmatpush.msra.mxu0 %v487
    %588 = vmatpush.msra.mxu0 %v485
    %589 = vmatmul.f32.gmra.mxu0 %v482
    %v590 = vpop.f32.mrf.mxu0
    %v591 = vadd.f32 %v527, %v590
    %592 = vdwg.mxu0
    %593 = vmatpush.msra.mxu0 0.0
    %594 = vmatpush.msra.mxu0 0.0
    %595 = vmatpush.msra.mxu0 0.0
    %596 = vmatpush.msra.mxu0 0.0
    %597 = vmatpush.msra.mxu0 0.0
    %598 = vmatpush.msra.mxu0 0.0
    %599 = vmatpush.msra.mxu0 0.0
    %600 = vmatpush.msra.mxu0 0.0
    %601 = vmatpush.msra.mxu0 0.0
    %602 = vmatpush.msra.mxu0 0.0
    %603 = vmatpush.msra.mxu0 0.0
    %604 = vmatpush.msra.mxu0 0.0
    %605 = vmatpush.msra.mxu0 %v523
    %606 = vmatpush.msra.mxu0 %v521
    %607 = vmatpush.msra.mxu0 %v519
    %608 = vmatpush.msra.mxu0 %v517
    %609 = vmatmul.f32.gmra.mxu0 %v531
    %v610 = vpop.f32.mrf.mxu0
    %v611 = vadd.f32 %v591, %v610
    %612 = vdwg.mxu0
    %v613 = vmax.f32 %v571, 0.0
    %v614 = vmax.f32 %v611, 0.0
    %v615 = vld [vmem:[%s7] sm:$0xff]
    %v616 = vld [vmem:[%s7 + $0x8] sm:$0xff]
    %v617 = vld [vmem:[%s7 + $0x10] sm:$0xff]
    %v618 = vld [vmem:[%s7 + $0x18] sm:$0xff]
    %v619 = vld [vmem:[%s7 + $0x20] sm:$0xff]
    %v620 = vld [vmem:[%s7 + $0x28] sm:$0xff]
    %v621 = vld [vmem:[%s7 + $0x30] sm:$0xff]
    %v622 = vld [vmem:[%s7 + $0x38] sm:$0xff]
    %v623 = vld [vmem:[%s7 + $0x40] sm:$0xff]
    %v624 = vld [vmem:[%s7 + $0x48] sm:$0xff]
    %v625 = vld [vmem:[%s7 + $0x50] sm:$0xff]
    %v626 = vld [vmem:[%s7 + $0x58] sm:$0xff]
    %v627 = vld [vmem:[%s7 + $0x60] sm:$0xff]
    %v628 = vld [vmem:[%s7 + $0x68] sm:$0xff]
    %v629 = vld [vmem:[%s7 + $0x70] sm:$0xff]
    %v630 = vld [vmem:[%s7 + $0x78] sm:$0xff]
    %v631 = vld [vmem:[%s7 + $0x80] sm:$0xff]
    %v632 = vld [vmem:[%s7 + $0x88] sm:$0xff]
    %v633 = vld [vmem:[%s7 + $0x90] sm:$0xff]
    %v634 = vld [vmem:[%s7 + $0x98] sm:$0xff]
    %v635 = vld [vmem:[%s7 + $0xa0] sm:$0xff]
    %v636 = vld [vmem:[%s7 + $0xa8] sm:$0xff]
    %v637 = vld [vmem:[%s7 + $0xb0] sm:$0xff]
    %v638 = vld [vmem:[%s7 + $0xb8] sm:$0xff]
    %v639 = vld [vmem:[%s7 + $0xc0] sm:$0xff]
    %v640 = vld [vmem:[%s7 + $0xc8] sm:$0xff]
    %v641 = vld [vmem:[%s7 + $0xd0] sm:$0xff]
    %v642 = vld [vmem:[%s7 + $0xd8] sm:$0xff]
    %v643 = vld [vmem:[%s7 + $0xe0] sm:$0xff]
    %v644 = vld [vmem:[%s7 + $0xe8] sm:$0xff]
    %v645 = vld [vmem:[%s7 + $0xf0] sm:$0xff]
    %v646 = vld [vmem:[%s7 + $0xf8] sm:$0xff]
    %v647 = vld [vmem:[%s8] sm:$0x1]
    %v649 = vperm.slane %v647, 0
    %651 = vmatpush.msra.mxu0 %v630
    %652 = vmatpush.msra.mxu0 %v629
    %653 = vmatpush.msra.mxu0 %v628
    %654 = vmatpush.msra.mxu0 %v627
    %655 = vmatpush.msra.mxu0 %v626
    %656 = vmatpush.msra.mxu0 %v625
    %657 = vmatpush.msra.mxu0 %v624
    %658 = vmatpush.msra.mxu0 %v623
    %659 = vmatpush.msra.mxu0 %v622
    %660 = vmatpush.msra.mxu0 %v621
    %661 = vmatpush.msra.mxu0 %v620
    %662 = vmatpush.msra.mxu0 %v619
    %663 = vmatpush.msra.mxu0 %v618
    %664 = vmatpush.msra.mxu0 %v617
    %665 = vmatpush.msra.mxu0 %v616
    %666 = vmatpush.msra.mxu0 %v615
    %667 = vmatmul.f32.gmra.mxu0 %v613
    %v668 = vpop.f32.mrf.mxu0
    %v669 = vadd.f32 %v649, %v668
    %670 = vdwg.mxu0
    %671 = vmatpush.msra.mxu0 %v646
    %672 = vmatpush.msra.mxu0 %v645
    %673 = vmatpush.msra.mxu0 %v644
    %674 = vmatpush.msra.mxu0 %v643
    %675 = vmatpush.msra.mxu0 %v642
    %676 = vmatpush.msra.mxu0 %v641
    %677 = vmatpush.msra.mxu0 %v640
    %678 = vmatpush.msra.mxu0 %v639
    %679 = vmatpush.msra.mxu0 %v638
    %680 = vmatpush.msra.mxu0 %v637
    %681 = vmatpush.msra.mxu0 %v636
    %682 = vmatpush.msra.mxu0 %v635
    %683 = vmatpush.msra.mxu0 %v634
    %684 = vmatpush.msra.mxu0 %v633
    %685 = vmatpush.msra.mxu0 %v632
    %686 = vmatpush.msra.mxu0 %v631
    %687 = vmatmul.f32.gmra.mxu0 %v614
    %v688 = vpop.f32.mrf.mxu0
    %v689 = vadd.f32 %v669, %v688
    %690 = vdwg.mxu0
    %v691 = vmax.f32 %v689, 0.0
    %v692 = vld [vmem:[%s9] sm:$0xff]
    %v693 = vld [vmem:[%s9 + $0x8] sm:$0xff]
    %v694 = vld [vmem:[%s9 + $0x10] sm:$0xff]
    %v695 = vld [vmem:[%s9 + $0x18] sm:$0xff]
    %v696 = vld [vmem:[%s9 + $0x20] sm:$0xff]
    %v697 = vld [vmem:[%s9 + $0x28] sm:$0xff]
    %v698 = vld [vmem:[%s9 + $0x30] sm:$0xff]
    %v699 = vld [vmem:[%s9 + $0x38] sm:$0xff]
    %v700 = vld [vmem:[%s9 + $0x40] sm:$0xff]
    %v701 = vld [vmem:[%s9 + $0x48] sm:$0xff]
    %v702 = vld [vmem:[%s9 + $0x50] sm:$0xff]
    %v703 = vld [vmem:[%s9 + $0x58] sm:$0xff]
    %v704 = vld [vmem:[%s9 + $0x60] sm:$0xff]
    %v705 = vld [vmem:[%s9 + $0x68] sm:$0xff]
    %v706 = vld [vmem:[%s9 + $0x70] sm:$0xff]
    %v707 = vld [vmem:[%s9 + $0x78] sm:$0xff]
    %v708 = vld [vmem:[%s9 + $0x80] sm:$0xff]
    %v709 = vld [vmem:[%s9 + $0x88] sm:$0xff]
    %v710 = vld [vmem:[%s9 + $0x90] sm:$0xff]
    %v711 = vld [vmem:[%s9 + $0x98] sm:$0xff]
    %v712 = vld [vmem:[%s9 + $0xa0] sm:$0xff]
    %v713 = vld [vmem:[%s9 + $0xa8] sm:$0xff]
    %v714 = vld [vmem:[%s9 + $0xb0] sm:$0xff]
    %v715 = vld [vmem:[%s9 + $0xb8] sm:$0xff]
    %v716 = vld [vmem:[%s9 + $0xc0] sm:$0xff]
    %v717 = vld [vmem:[%s9 + $0xc8] sm:$0xff]
    %v718 = vld [vmem:[%s9 + $0xd0] sm:$0xff]
    %v719 = vld [vmem:[%s9 + $0xd8] sm:$0xff]
    %v720 = vld [vmem:[%s9 + $0xe0] sm:$0xff]
    %v721 = vld [vmem:[%s9 + $0xe8] sm:$0xff]
    %v722 = vld [vmem:[%s9 + $0xf0] sm:$0xff]
    %v723 = vld [vmem:[%s9 + $0xf8] sm:$0xff]
    %v724 = vld [vmem:[%s10] sm:$0x3]
    %v726 = vperm.slane %v724, 0
    %v727 = vperm.slane %v724, 1
    %730 = vmatpush.msra.mxu0 %v722
    %731 = vmatpush.msra.mxu0 %v720
    %732 = vmatpush.msra.mxu0 %v718
    %733 = vmatpush.msra.mxu0 %v716
    %734 = vmatpush.msra.mxu0 %v714
    %735 = vmatpush.msra.mxu0 %v712
    %736 = vmatpush.msra.mxu0 %v710
    %737 = vmatpush.msra.mxu0 %v708
    %738 = vmatpush.msra.mxu0 %v706
    %739 = vmatpush.msra.mxu0 %v704
    %740 = vmatpush.msra.mxu0 %v702
    %741 = vmatpush.msra.mxu0 %v700
    %742 = vmatpush.msra.mxu0 %v698
    %743 = vmatpush.msra.mxu0 %v696
    %744 = vmatpush.msra.mxu0 %v694
    %745 = vmatpush.msra.mxu0 %v692
    %746 = vmatmul.f32.gmra.mxu0 %v691
    %v747 = vpop.f32.mrf.mxu0
    %v748 = vadd.f32 %v726, %v747
    %749 = vdwg.mxu0
    %750 = vmatpush.msra.mxu0 %v723
    %751 = vmatpush.msra.mxu0 %v721
    %752 = vmatpush.msra.mxu0 %v719
    %753 = vmatpush.msra.mxu0 %v717
    %754 = vmatpush.msra.mxu0 %v715
    %755 = vmatpush.msra.mxu0 %v713
    %756 = vmatpush.msra.mxu0 %v711
    %757 = vmatpush.msra.mxu0 %v709
    %758 = vmatpush.msra.mxu0 %v707
    %759 = vmatpush.msra.mxu0 %v705
    %760 = vmatpush.msra.mxu0 %v703
    %761 = vmatpush.msra.mxu0 %v701
    %762 = vmatpush.msra.mxu0 %v699
    %763 = vmatpush.msra.mxu0 %v697
    %764 = vmatpush.msra.mxu0 %v695
    %765 = vmatpush.msra.mxu0 %v693
    %766 = vmatmul.f32.gmra.mxu0 %v691
    %v767 = vpop.f32.mrf.mxu0
    %v768 = vadd.f32 %v727, %v767
    %769 = vdwg.mxu0
    %v770 = vmax.f32 %v748, 0.0
    %v771 = vmax.f32 %v768, 0.0
    %v772 = vld [vmem:[%s11] sm:$0xff]
    %v773 = vld [vmem:[%s11 + $0x8] sm:$0xff]
    %v774 = vld [vmem:[%s11 + $0x10] sm:$0xff]
    %v775 = vld [vmem:[%s11 + $0x18] sm:$0xff]
    %v776 = vld [vmem:[%s11 + $0x20] sm:$0xff]
    %v777 = vld [vmem:[%s11 + $0x28] sm:$0xff]
    %v778 = vld [vmem:[%s11 + $0x30] sm:$0xff]
    %v779 = vld [vmem:[%s11 + $0x38] sm:$0xff]
    %v780 = vld [vmem:[%s11 + $0x40] sm:$0xff]
    %v781 = vld [vmem:[%s11 + $0x48] sm:$0xff]
    %v782 = vld [vmem:[%s11 + $0x50] sm:$0xff]
    %v783 = vld [vmem:[%s11 + $0x58] sm:$0xff]
    %v784 = vld [vmem:[%s11 + $0x60] sm:$0xff]
    %v785 = vld [vmem:[%s11 + $0x68] sm:$0xff]
    %v786 = vld [vmem:[%s11 + $0x70] sm:$0xff]
    %v787 = vld [vmem:[%s11 + $0x78] sm:$0xff]
    %v788 = vld [vmem:[%s11 + $0x80] sm:$0xff]
    %v789 = vld [vmem:[%s11 + $0x88] sm:$0xff]
    %v790 = vld [vmem:[%s11 + $0x90] sm:$0xff]
    %v791 = vld [vmem:[%s11 + $0x98] sm:$0xff]
    %v792 = vld [vmem:[%s11 + $0xa0] sm:$0xff]
    %v793 = vld [vmem:[%s11 + $0xa8] sm:$0xff]
    %v794 = vld [vmem:[%s11 + $0xb0] sm:$0xff]
    %v795 = vld [vmem:[%s11 + $0xb8] sm:$0xff]
    %v796 = vld [vmem:[%s11 + $0xc0] sm:$0xff]
    %v797 = vld [vmem:[%s11 + $0xc8] sm:$0xff]
    %v798 = vld [vmem:[%s11 + $0xd0] sm:$0xff]
    %v799 = vld [vmem:[%s11 + $0xd8] sm:$0xff]
    %v800 = vld [vmem:[%s11 + $0xe0] sm:$0xff]
    %v801 = vld [vmem:[%s11 + $0xe8] sm:$0xff]
    %v802 = vld [vmem:[%s11 + $0xf0] sm:$0xff]
    %v803 = vld [vmem:[%s11 + $0xf8] sm:$0xff]
    %v804 = vld [vmem:[%s12] sm:$0x1]
    %v806 = vperm.slane %v804, 0
    %808 = vmatpush.msra.mxu0 %v787
    %809 = vmatpush.msra.mxu0 %v786
    %810 = vmatpush.msra.mxu0 %v785
    %811 = vmatpush.msra.mxu0 %v784
    %812 = vmatpush.msra.mxu0 %v783
    %813 = vmatpush.msra.mxu0 %v782
    %814 = vmatpush.msra.mxu0 %v781
    %815 = vmatpush.msra.mxu0 %v780
    %816 = vmatpush.msra.mxu0 %v779
    %817 = vmatpush.msra.mxu0 %v778
    %818 = vmatpush.msra.mxu0 %v777
    %819 = vmatpush.msra.mxu0 %v776
    %820 = vmatpush.msra.mxu0 %v775
    %821 = vmatpush.msra.mxu0 %v774
    %822 = vmatpush.msra.mxu0 %v773
    %823 = vmatpush.msra.mxu0 %v772
    %824 = vmatmul.f32.gmra.mxu0 %v770
    %v825 = vpop.f32.mrf.mxu0
    %v826 = vadd.f32 %v806, %v825
    %827 = vdwg.mxu0
    %828 = vmatpush.msra.mxu0 %v803
    %829 = vmatpush.msra.mxu0 %v802
    %830 = vmatpush.msra.mxu0 %v801
    %831 = vmatpush.msra.mxu0 %v800
    %832 = vmatpush.msra.mxu0 %v799
    %833 = vmatpush.msra.mxu0 %v798
    %834 = vmatpush.msra.mxu0 %v797
    %835 = vmatpush.msra.mxu0 %v796
    %836 = vmatpush.msra.mxu0 %v795
    %837 = vmatpush.msra.mxu0 %v794
    %838 = vmatpush.msra.mxu0 %v793
    %839 = vmatpush.msra.mxu0 %v792
    %840 = vmatpush.msra.mxu0 %v791
    %841 = vmatpush.msra.mxu0 %v790
    %842 = vmatpush.msra.mxu0 %v789
    %843 = vmatpush.msra.mxu0 %v788
    %844 = vmatmul.f32.gmra.mxu0 %v771
    %v845 = vpop.f32.mrf.mxu0
    %v846 = vadd.f32 %v826, %v845
    %847 = vdwg.mxu0
    %848 = vst [vmem:[#allocation3] sm:$0xff] %v846
    // Predicated region
    $region54: #{tpu_custom_call.1} parent=1 // pred_check
      _
    $region55: #{tpu_custom_call.1} parent=1 // pred_check_branch
      %850 = sbr.rel (0) target = $region57
    $region56: #{tpu_custom_call.1} parent=1 // pred_region
      %852 = vsyncadd [#allocation4], 0
      %s854 = sshll.u32 [#allocation3], 4
      %s855 = int_to_ptr.vmem [resolvable:$true] %s854
      %s856 = sshll.u32 %s13, 4
      %s857 = int_to_ptr.hbm [resolvable:$true] %s856
      %859 = dma.vmem_to_hbm [thread:$0]  %s855, 128, %s857, [#allocation4]
    $region57: #{tpu_custom_call.1} parent=1 // pred_fallthru
      _
    // Predicated region
    $region58: #{tpu_custom_call.1} parent=1 // pred_check
      _
    $region59: #{tpu_custom_call.1} parent=1 // pred_check_branch
      %861 = sbr.rel (0) target = $region61
    $region60: #{tpu_custom_call.1} parent=1 // pred_region
      %863 = dma.done [#allocation4], 128
    $region61: #{tpu_custom_call.1} parent=1 // pred_fallthru
      _
    %864 = vsyncpa [#allocation4], 1

</llo_original>
